<compile_context>
chip_gen: v6e
topology: v6e:2x2x1
jax: 0.10.0
libtpu: 0.0.40
codegen_flags: <defaults>
</compile_context>

<pallas_src>
import jax
import jax.numpy as jnp
import numpy as np
from jax.experimental import pallas as pl
from jax.experimental.pallas import tpu as pltpu

_LANE = 128       # lane width; HW tiles of the two-pass path are multiples of this
_PAD_BASE = 8     # sublane-aligned offset of the data in the conv shift scratch


def _round_up(v, m):
    return (v + m - 1) // m * m


def _cdiv(a, b):
    return (a + b - 1) // b


def _tpu_vmem_bytes():
    try:
        info = pltpu.get_tpu_info()
        for attr in ("vmem_capacity_bytes", "vmem_size_bytes", "vmem_bytes"):
            v = getattr(info, attr, None)
            if v:
                return int(v)
    except Exception:
        pass
    return 128 << 20


def _chip_budgets():
    """Generation-aware VMEM budgets.

    Returns (vmem_cap, fused_block_max, tile_target, is_v7x):
      vmem_cap        : largest vmem_limit_bytes we will ever request.
      fused_block_max : largest (layout-padded) per-batch x block for the fused
                        path such that 2*(in) + 2*(out) buffers fit under vmem_cap.
      tile_target     : target per-tile bytes for the two-pass streaming path.
    """
    vmem = _tpu_vmem_bytes()
    kind = ""
    try:
        kind = jax.devices()[0].device_kind.lower()
    except Exception:
        pass
    is_v7x = ("v7" in kind) or (vmem <= (64 << 20) + 1)
    if is_v7x:                       # 64 MiB physical VMEM per TensorCore
        vmem_cap = 52 << 20
        tile_target = 6 << 20
    else:                            # v5e / v6e: 128 MiB VMEM
        vmem_cap = 100 << 20
        tile_target = 12 << 20
    fused_block_max = (vmem_cap - (2 << 20)) // 4
    return vmem_cap, fused_block_max, tile_target, is_v7x


def _padded_block_bytes(C, lanes, itemsize):
    """VMEM bytes of a (C, lanes) slab after (sublane, lane) layout padding."""
    sub = 8 * max(1, 4 // itemsize)
    return _round_up(C, sub) * _round_up(lanes, _LANE) * itemsize


def _buffered_spec(block_shape, index_map, n):
    """BlockSpec with n-deep pipelining; falls back to default double-buffering."""
    try:
        return pl.BlockSpec(block_shape, index_map, pipeline_mode=pl.Buffered(n))
    except TypeError:
        return pl.BlockSpec(block_shape, index_map)


def _channel_conv_sigmoid(row_sum, mpad_ref, params_ref, C, k):
    """sigmoid(bias + sum_j (w_j / HW) * row_sum[c + j - pad]) with zero padding.

    row_sum   : (C, 1) f32 per-channel spatial sums.
    mpad_ref  : (C + 2*_PAD_BASE, 1) f32 VMEM scratch (zero-padded shift buffer).
    params_ref: (k + 1,) f32 SMEM array = [w_0/HW, ..., w_{k-1}/HW, bias].
    """
    pad = (k - 1) // 2
    mpad_ref[...] = jnp.zeros_like(mpad_ref)
    mpad_ref[pl.ds(_PAD_BASE, C), :] = row_sum               # sublane-aligned store
    y = jnp.full((C, 1), params_ref[k], dtype=jnp.float32)   # bias
    for j in range(k):                                       # tiny static unroll
        y = y + params_ref[j] * mpad_ref[pl.ds(_PAD_BASE + j - pad, C), :]
    return jax.nn.sigmoid(y)                                 # (C, 1) f32


def _make_fused_kernel(C, k):
    def kernel(x_ref, params_ref, o_ref, mpad_ref):
        # Reduce in f32 without keeping an upcast copy of the whole block alive.
        row_sum = jnp.sum(x_ref[0], axis=1, keepdims=True, dtype=jnp.float32)
        attn = _channel_conv_sigmoid(row_sum, mpad_ref, params_ref, C, k)
        # Elementwise scale stays in the input's native dtype (attn downcast here).
        o_ref[0] = x_ref[0] * attn.astype(o_ref.dtype)
    return kernel


def _make_gap_kernel(C, hw_tile, HW, n_ti, needs_mask):
    """Pass 1: per-(split, batch) partial per-channel spatial sums over HW tiles."""
    def kernel(x_ref, part_ref):
        s = pl.program_id(0)
        t = pl.program_id(2)

        @pl.when(t == 0)
        def _init():
            part_ref[...] = jnp.zeros_like(part_ref)

        x = x_ref[0]                                          # (C, hw_tile)
        if needs_mask:
            # Mask ragged / virtual tiles: stale VMEM lanes past HW must not
            # pollute the sums.
            start = (s * n_ti + t) * hw_tile
            col = jax.lax.broadcasted_iota(jnp.int32, (C, hw_tile), 1)
            x = jnp.where(start + col < HW, x, jnp.zeros((), x.dtype))
        psum = jnp.sum(x, axis=1, keepdims=True, dtype=jnp.float32)   # (C, 1)
        part_ref[...] = part_ref[...] + psum[None, None]
    return kernel


def _make_finalize_kernel(C, k):
    """Combine split partial sums + channel conv + sigmoid (tiny per-batch block)."""
    def kernel(part_ref, params_ref, attn_ref, mpad_ref):
        row_sum = jnp.sum(part_ref[...], axis=(0, 1))         # (C, 1) f32
        attn_ref[0] = _channel_conv_sigmoid(row_sum, mpad_ref, params_ref, C, k)
    return kernel


def _scale_kernel(x_ref, attn_ref, o_ref):
    o_ref[0] = x_ref[0] * attn_ref[0].astype(o_ref.dtype)


def eca_attention(x, conv_w, conv_b, *, hw_tile=None, force_two_pass=False,
                  gap_splits=None):
    """ECA forward. x: [B, C, H, W] (NCHW); conv_w: [1, 1, k]; conv_b: [1]."""
    B, C, H, W = x.shape
    HW = H * W
    k = int(conv_w.shape[-1])
    assert k % 2 == 1, "kernel_size must be odd"
    pad = (k - 1) // 2
    assert pad <= _PAD_BASE, "kernel_size too large for the shift scratch"
    itemsize = jnp.dtype(x.dtype).itemsize

    vmem_cap, fused_block_max, tile_target, is_v7x = _chip_budgets()

    # Taps pre-scaled by 1/HW (kernels work on raw spatial sums) + bias -> SMEM.
    params = jnp.concatenate([
        conv_w.reshape(k).astype(jnp.float32) / float(HW),
        conv_b.reshape(1).astype(jnp.float32),
    ])                                                        # (k + 1,) f32

    x_flat = x.reshape(B, C, HW)          # metadata-only reshape, no HBM copy
    params_spec = pl.BlockSpec(memory_space=pltpu.MemorySpace.SMEM)
    conv_scratch = [pltpu.VMEM((C + 2 * _PAD_BASE, 1), jnp.float32)]

    block_vmem = _padded_block_bytes(C, HW, itemsize)         # per-batch slab in VMEM

    use_fused = (
        (not force_two_pass)
        and hw_tile is None
        and gap_splits is None
        and block_vmem <= fused_block_max
        # v7x only: a (B,)-grid with B == 1 leaves one of the two TensorCores
        # idle, so the (3N-traffic) two-pass path can pay off there.  On
        # single-TC v5e/v6e the fused 2N-traffic path always wins when it fits.
        and not (is_v7x and B == 1 and block_vmem > (2 << 20))
    )

    if use_fused:
        # Single pass, one (1, C, HW) block per batch element.  Last dim is the
        # full array dim, so no lane padding / host-side pad is needed; the tail
        # vreg masked vst is accepted (mem-bound kernel, VPU/vst far from full).
        footprint = 4 * block_vmem + (1 << 20)                # 2x in + 2x out bufs
        vmem_limit = int(min(vmem_cap, max(footprint, 16 << 20)))
        out_flat = pl.pallas_call(
            _make_fused_kernel(C, k),
            out_shape=jax.ShapeDtypeStruct((B, C, HW), x.dtype),
            grid_spec=pltpu.PrefetchScalarGridSpec(
                num_scalar_prefetch=0,
                grid=(B,),
                in_specs=[pl.BlockSpec((1, C, HW), lambda b: (b, 0, 0)),
                          params_spec],
                out_specs=pl.BlockSpec((1, C, HW), lambda b: (b, 0, 0)),
                scratch_shapes=conv_scratch,
            ),
            compiler_params=pltpu.CompilerParams(
                dimension_semantics=("parallel",),
                vmem_limit_bytes=vmem_limit),
        )(x_flat, params)
        return out_flat.reshape(B, C, H, W)

    # ---------------- two-pass HW-tiled path (x stays unpadded) ----------------
    if hw_tile is None:
        sub = 8 * max(1, 4 // itemsize)
        per_lane_bytes = _round_up(C, sub) * itemsize
        max_tile = max(_LANE, (tile_target // per_lane_bytes) // _LANE * _LANE)
    else:
        max_tile = max(_LANE, _round_up(int(hw_tile), _LANE))

    if max_tile >= HW:
        hw_tile, n_t = HW, 1              # full-dim block: exempt from the 128 rule
    else:
        n_t = _cdiv(HW, max_tile)
        hw_tile = _round_up(_cdiv(HW, n_t), _LANE)            # balanced, lane-dense
        n_t = _cdiv(HW, hw_tile)

    # v7x + B == 1: shard the GAP reduction across both TensorCores.
    if gap_splits is None:
        gap_splits = 2 if (is_v7x and B == 1) else 1
    n_split = max(1, min(int(gap_splits), n_t))
    n_ti = _cdiv(n_t, n_split)
    has_virtual = (n_split * n_ti != n_t)                     # splits not even
    needs_mask = (n_t * hw_tile != HW) or has_virtual

    tile_vmem = _padded_block_bytes(C, hw_tile, itemsize)
    vmem_gap = int(min(vmem_cap, max(3 * tile_vmem + (2 << 20), 16 << 20)))
    vmem_scale = int(min(vmem_cap, max(4 * tile_vmem + (2 << 20), 16 << 20)))

    # Pass 1: per-channel partial sums.  Input stream triple-buffered; ragged /
    # virtual tiles are masked in-kernel (no host-side padding of x).
    if has_virtual:
        def x_gap_map(s, b, t):                               # clamp virtual tiles
            return (b, 0, jnp.minimum(s * n_ti + t, n_t - 1))
    else:
        def x_gap_map(s, b, t):
            return (b, 0, s * n_ti + t)

    partials = pl.pallas_call(
        _make_gap_kernel(C, hw_tile, HW, n_ti, needs_mask),
        out_shape=jax.ShapeDtypeStruct((n_split, B, C, 1), jnp.float32),
        grid_spec=pltpu.PrefetchScalarGridSpec(
            num_scalar_prefetch=0,
            grid=(n_split, B, n_ti),
            in_specs=[_buffered_spec((1, C, hw_tile), x_gap_map, 3)],
            out_specs=pl.BlockSpec((1, 1, C, 1), lambda s, b, t: (s, b, 0, 0)),
        ),
        compiler_params=pltpu.CompilerParams(
            dimension_semantics=("parallel", "parallel", "arbitrary"),
            vmem_limit_bytes=vmem_gap),
    )(x_flat)

    # Finalize: combine split partials + channel conv + sigmoid (negligible traffic).
    attn = pl.pallas_call(
        _make_finalize_kernel(C, k),
        out_shape=jax.ShapeDtypeStruct((B, C, 1), jnp.float32),
        grid_spec=pltpu.PrefetchScalarGridSpec(
            num_scalar_prefetch=0,
            grid=(B,),
            in_specs=[pl.BlockSpec((n_split, 1, C, 1), lambda b: (0, b, 0, 0)),
                      params_spec],
            out_specs=pl.BlockSpec((1, C, 1), lambda b: (b, 0, 0)),
            scratch_shapes=conv_scratch,
        ),
        compiler_params=pltpu.CompilerParams(
            dimension_semantics=("parallel",)),
    )(partials, params)

    # Pass 2: out = x * attn, fully parallel over (batch, HW tile).  The ragged
    # last tile needs no mask: OOB reads only feed OOB writes, which are dropped.
    out_flat = pl.pallas_call(
        _scale_kernel,
        out_shape=jax.ShapeDtypeStruct((B, C, HW), x.dtype),
        grid_spec=pltpu.PrefetchScalarGridSpec(
            num_scalar_prefetch=0,
            grid=(B, n_t),
            in_specs=[pl.BlockSpec((1, C, hw_tile), lambda b, t: (b, 0, t)),
                      pl.BlockSpec((1, C, 1), lambda b, t: (b, 0, 0))],
            out_specs=pl.BlockSpec((1, C, hw_tile), lambda b, t: (b, 0, t)),
        ),
        compiler_params=pltpu.CompilerParams(
            dimension_semantics=("parallel", "parallel"),
            vmem_limit_bytes=vmem_scale),
    )(x_flat, attn)
    return out_flat.reshape(B, C, H, W)


def eca_reference(x, conv_w, conv_b):
    """Pure-JAX reference mirroring the PyTorch forward exactly."""
    B, C, H, W = x.shape
    k = conv_w.shape[-1]
    pad = (k - 1) // 2
    m = jnp.mean(x, axis=(2, 3))                              # [B, C]  (GAP)
    m_pad = jnp.pad(m, ((0, 0), (pad, pad)))                  # [B, C + 2*pad]
    w = conv_w.reshape(k)
    y = sum(w[j] * m_pad[:, j:j + C] for j in range(k)) + conv_b[0]  # [B, C]
    attn = jax.nn.sigmoid(y)
    return x * attn[:, :, None, None]


if __name__ == "__main__":
    key = jax.random.PRNGKey(0)
    kx, kw, kb, kx2, kx3 = jax.random.split(key, 5)

    kernel_size = 3
    bound = 1.0 / np.sqrt(1 * kernel_size)   # PyTorch Conv1d fan-in uniform init
    conv_w = jax.random.uniform(kw, (1, 1, kernel_size), jnp.float32, -bound, bound)
    conv_b = jax.random.uniform(kb, (1,), jnp.float32, -bound, bound)

    # Case 1: small feature map -> fused single-pass path (block last dim = HW).
    B, C, H, W = 2, 4, 16, 16
    x = jax.random.normal(kx, (B, C, H, W), dtype=jnp.float32)
    out = jax.block_until_ready(eca_attention(x, conv_w, conv_b))
    ref = eca_reference(x, conv_w, conv_b)
    np.testing.assert_allclose(np.asarray(out), np.asarray(ref), rtol=1e-5, atol=1e-5)

    # Case 2: non-multiple-of-128 spatial size, forced two-pass HW tiling
    # (exercises the in-kernel ragged-tile mask; x is never padded on the host).
    B2, C2, H2, W2 = 2, 8, 24, 24
    x2 = jax.random.normal(kx2, (B2, C2, H2, W2), dtype=jnp.float32)
    out2 = jax.block_until_ready(
        eca_attention(x2, conv_w, conv_b, force_two_pass=True, hw_tile=256))
    ref2 = eca_reference(x2, conv_w, conv_b)
    np.testing.assert_allclose(np.asarray(out2), np.asarray(ref2), rtol=1e-5, atol=1e-5)

    # Case 3: B == 1 with the GAP pass split 2-way (the v7x dual-TensorCore layout),
    # odd tile count -> exercises the clamped virtual-tile index + full masking.
    B3, C3, H3, W3 = 1, 16, 15, 20
    x3 = jax.random.normal(kx3, (B3, C3, H3, W3), dtype=jnp.float32)
    out3 = jax.block_until_ready(
        eca_attention(x3, conv_w, conv_b, force_two_pass=True, hw_tile=128,
                      gap_splits=2))
    ref3 = eca_reference(x3, conv_w, conv_b)
    np.testing.assert_allclose(np.asarray(out3), np.asarray(ref3), rtol=1e-5, atol=1e-5)

    print("KERNEL_OK")
</pallas_src>

<mosaic_0001>
module attributes {stable_mosaic.version = 11 : i64} {
  func.func @kernel(%arg0: i32, %arg1: memref<1x4x256xf32, #tpu.memory_space<vmem>>, %arg2: memref<4xf32, #tpu.memory_space<smem>>, %arg3: memref<1x4x256xf32, #tpu.memory_space<vmem>>, %arg4: memref<20x1xf32, #tpu.memory_space<vmem>>) attributes {dimension_semantics = [#tpu.dimension_semantics<parallel>], iteration_bounds = array<i64: 2>, scalar_prefetch = 0 : i64, scratch_operands = 1 : i64, tpu.core_type = #tpu.core_type<tc>, window_params = [{transform_indices = @transform_0, window_bounds = array<i64: 1, 4, 256>}, {transform_indices = @transform_1, window_bounds = array<i64: 4>}, {transform_indices = @transform_2, window_bounds = array<i64: 1, 4, 256>}]} {
    %c0 = arith.constant 0 : index
    %c0_0 = arith.constant 0 : index
    %c0_1 = arith.constant 0 : index
    %0 = vector.load %arg1[%c0, %c0_0, %c0_1] : memref<1x4x256xf32, #tpu.memory_space<vmem>>, vector<1x4x256xf32>
    %1 = vector.shape_cast %0 : vector<1x4x256xf32> to vector<4x256xf32>
    %cst = arith.constant dense<0.000000e+00> : vector<4xf32>
    %2 = vector.multi_reduction <add>, %1, %cst [1] : vector<4x256xf32> to vector<4xf32>
    %3 = vector.shape_cast %2 : vector<4xf32> to vector<4x1xf32>
    %cst_2 = arith.constant 0.000000e+00 : f32
    %4 = vector.broadcast %cst_2 : f32 to vector<20x1xf32>
    %c0_3 = arith.constant 0 : index
    %c0_4 = arith.constant 0 : index
    %5 = vector.load %arg4[%c0_3, %c0_4] : memref<20x1xf32, #tpu.memory_space<vmem>>, vector<20x1xf32>
    tpu.vector_store %arg4[%c0_3, %c0_4], %4 {strides = array<i32>} : memref<20x1xf32, #tpu.memory_space<vmem>>, vector<20x1xf32>,
    %c8 = arith.constant 8 : index
    %c0_5 = arith.constant 0 : index
    %6 = vector.load %arg4[%c8, %c0_5] : memref<20x1xf32, #tpu.memory_space<vmem>>, vector<4x1xf32>
    tpu.vector_store %arg4[%c8, %c0_5], %3 {strides = array<i32>} : memref<20x1xf32, #tpu.memory_space<vmem>>, vector<4x1xf32>,
    %c3 = arith.constant 3 : index
    %7 = memref.load %arg2[%c3] : memref<4xf32, #tpu.memory_space<smem>>
    %8 = vector.broadcast %7 : f32 to vector<4x1xf32>
    %c0_6 = arith.constant 0 : index
    %9 = memref.load %arg2[%c0_6] : memref<4xf32, #tpu.memory_space<smem>>
    %c7 = arith.constant 7 : index
    %c0_7 = arith.constant 0 : index
    %10 = vector.load %arg4[%c7, %c0_7] : memref<20x1xf32, #tpu.memory_space<vmem>>, vector<4x1xf32>
    %11 = vector.broadcast %9 : f32 to vector<4x1xf32>
    %12 = arith.mulf %11, %10 : vector<4x1xf32>
    %13 = arith.addf %8, %12 : vector<4x1xf32>
    %c1 = arith.constant 1 : index
    %14 = memref.load %arg2[%c1] : memref<4xf32, #tpu.memory_space<smem>>
    %c8_8 = arith.constant 8 : index
    %c0_9 = arith.constant 0 : index
    %15 = vector.load %arg4[%c8_8, %c0_9] : memref<20x1xf32, #tpu.memory_space<vmem>>, vector<4x1xf32>
    %16 = vector.broadcast %14 : f32 to vector<4x1xf32>
    %17 = arith.mulf %16, %15 : vector<4x1xf32>
    %18 = arith.addf %13, %17 : vector<4x1xf32>
    %c2 = arith.constant 2 : index
    %19 = memref.load %arg2[%c2] : memref<4xf32, #tpu.memory_space<smem>>
    %c9 = arith.constant 9 : index
    %c0_10 = arith.constant 0 : index
    %20 = vector.load %arg4[%c9, %c0_10] : memref<20x1xf32, #tpu.memory_space<vmem>>, vector<4x1xf32>
    %21 = vector.broadcast %19 : f32 to vector<4x1xf32>
    %22 = arith.mulf %21, %20 : vector<4x1xf32>
    %23 = arith.addf %18, %22 : vector<4x1xf32>
    %24 = arith.negf %23 : vector<4x1xf32>
    %25 = math.exp %24 : vector<4x1xf32>
    %cst_11 = arith.constant 1.000000e+00 : f32
    %26 = vector.broadcast %cst_11 : f32 to vector<4x1xf32>
    %27 = arith.addf %26, %25 : vector<4x1xf32>
    %28 = arith.divf %26, %27 : vector<4x1xf32>
    %c0_12 = arith.constant 0 : index
    %c0_13 = arith.constant 0 : index
    %c0_14 = arith.constant 0 : index
    %29 = vector.load %arg1[%c0_12, %c0_13, %c0_14] : memref<1x4x256xf32, #tpu.memory_space<vmem>>, vector<1x4x256xf32>
    %30 = vector.shape_cast %29 : vector<1x4x256xf32> to vector<4x256xf32>
    %31 = vector.broadcast %28 : vector<4x1xf32> to vector<4x256xf32>
    %32 = arith.mulf %30, %31 : vector<4x256xf32>
    %c0_15 = arith.constant 0 : index
    %c0_16 = arith.constant 0 : index
    %c0_17 = arith.constant 0 : index
    %33 = vector.load %arg3[%c0_15, %c0_16, %c0_17] : memref<1x4x256xf32, #tpu.memory_space<vmem>>, vector<1x4x256xf32>
    %34 = vector.shape_cast %33 : vector<1x4x256xf32> to vector<4x256xf32>
    %35 = vector.shape_cast %32 : vector<4x256xf32> to vector<1x4x256xf32>
    tpu.vector_store %arg3[%c0_15, %c0_16, %c0_17], %35 {strides = array<i32>} : memref<1x4x256xf32, #tpu.memory_space<vmem>>, vector<1x4x256xf32>,
    return
  }
  func.func @transform_0(%arg0: i32) -> (i32, i32, i32) {
    %c0_i32 = arith.constant 0 : i32
    %c0_i32_0 = arith.constant 0 : i32
    %c0_i32_1 = arith.constant 0 : i32
    return %arg0, %c0_i32, %c0_i32_0 : i32, i32, i32
  }
  func.func @transform_1(%arg0: i32) -> i32 {
    %c0_i32 = arith.constant 0 : i32
    %c0_i32_0 = arith.constant 0 : i32
    return %c0_i32 : i32
  }
  func.func @transform_2(%arg0: i32) -> (i32, i32, i32) {
    %c0_i32 = arith.constant 0 : i32
    %c0_i32_0 = arith.constant 0 : i32
    %c0_i32_1 = arith.constant 0 : i32
    return %arg0, %c0_i32, %c0_i32_0 : i32, i32, i32
  }
}

</mosaic_0001>

<llo_original>
// kernel: tpu_custom_call.1
$region0: #{tpu_custom_call.1}
  #allocation0 [shape = 'u32[]', space=smem, size = 0x4, offset = 0x4, fixed_abs, tag = 'smem constant byte address 0x4 - core index']
  #allocation1 [shape = 'u32[144,128]{1,0:T(1,128)}', space=vmem, size = 0x12000, scoped, tag = 'internal scratch']
  #allocation2 [shape = 'f32[20,1]{1,0:T(8,128)}', space=vmem, size = 0x3000, scoped, tag = 'scratch operand']
  %s0 = inlined_call_operand.hbm [shape: f32[2,4,256], index: 0, kind: input, shape index: {}]
  %s1 = inlined_call_operand.vmem [shape: f32[4], index: 1, kind: input, shape index: {}]
  %s2 = inlined_call_operand.hbm [shape: f32[2,4,256], index: 2, kind: output, shape index: {}]
  %s3 = sld [smem:[#allocation0]]
  $region49: #{tpu_custom_call.1} parent=0
    _
  %s5 = ssub.s32 1, %s3
  %s6 = scalar_select 0, %s5, %s3
  $region1: #{tpu_custom_call.1} parent=0
    #allocation3 [shape = 'u8[8192]{0}', space=vmem, size = 0x2000, scoped, tag = 'input window, operand 0']
    #allocation4 [shape = 's32[2]{0}', space=sflag, size = 0x8, scoped, tag = 'scoped memory for tpu_custom_call.1']
    #allocation5 [shape = 's32[2]{0}', space=sflag, size = 0x8, scoped, tag = 'scoped memory for tpu_custom_call.1']
    #allocation6 [shape = 's32[2]{0}', space=sflag, size = 0x8, scoped, tag = 'scoped memory for tpu_custom_call.1']
    #allocation7 [shape = 'u8[512]{0}', space=smem, size = 0x200, scoped, tag = 'input window, operand 1, single buffered']
    #allocation8 [shape = 'u8[8192]{0}', space=vmem, size = 0x2000, scoped, tag = 'output window, operand 0']
    %7 = vsyncpa [#allocation4], 0
    %s8 = scalar_lea.sflag [#allocation4], 1
    %9 = vsyncpa %s8, 0
    %10 = vsyncpa [#allocation6], 0
    %11 = vsyncpa [#allocation5], 0
    %s12 = scalar_lea.sflag [#allocation5], 1
    %13 = vsyncpa %s12, 0
    loop: start=0, step=1, limit=4
    $region2: #{tpu_custom_call.1} parent=1 // loop_pre_header
      _
    $region3: #{tpu_custom_call.1} parent=1 // loop_header
      %s15 = sphi 0, %s19
      %p16 = scmp.ge.s32.totalorder %s15, 4
      %s25 = sphi 0, %s27
      %s28 = sphi 0, %s25
      %s29 = sphi 0, %s28
      %s45 = sphi 0, %s29
      %s49 = sphi 0, %s49
      %s51 = sphi 0, %s49
      %s52 = sphi 0, %s51
      %s66 = sphi 0, %s52
      %s72 = sphi 0, %s74
      %s75 = sphi 0, %s72
      %s76 = sphi 0, %s75
      %s92 = sphi 0, %s76
    $region4: #{tpu_custom_call.1} parent=1 // loop_header_branch
      %18 = sbr.rel (%p16) target = $region8
    $region5: #{tpu_custom_call.1} parent=1 // loop_body
      %s20 = ssub.s32 %s15, 1
      %s21 = ssub.s32 %s15, 2
      %s22 = sadd.s32 %s15, 1
      %s23 = ssub.s32 %s15, %s22
      %p24 = scmp.eq.s32.totalorder %s23, 0
      %s26 = sadd.s32 %s25, 1
      %s27 = scalar_select %p24, %s25, %s26
      %p30 = pneg %p24
      %p31 = scmp.eq.s32.totalorder %s15, 1
      %p32 = por %p30, %p31
      %p33 = scmp.ne.s32.totalorder %s25, %s28
      %p34 = scmp.eq.s32.totalorder %s15, 0
      %p35 = por %p33, %p34
      %p36 = scmp.ne.s32.totalorder %s25, %s28
      %p37 = scmp.eq.s32.totalorder %s20, 1
      %p38 = por %p36, %p37
      %p39 = scmp.ne.s32.totalorder %s28, %s29
      %p40 = scmp.eq.s32.totalorder %s20, 0
      %p41 = por %p39, %p40
      %p42 = scmp.ne.s32.totalorder %s28, %s29
      %p43 = scmp.eq.s32.totalorder %s21, 1
      %p44 = por %p42, %p43
      %p46 = scmp.ne.s32.totalorder %s29, %s45
      %p47 = scmp.eq.s32.totalorder %s21, 0
      %p48 = por %p46, %p47
      %s50 = sadd.s32 %s49, 1
      %p53 = scmp.eq.s32.totalorder %s15, 1
      %p54 = scmp.ne.s32.totalorder %s49, %s51
      %p55 = scmp.eq.s32.totalorder %s15, 0
      %p56 = por %p54, %p55
      %p57 = scmp.ne.s32.totalorder %s49, %s51
      %p58 = scmp.eq.s32.totalorder %s20, 1
      %p59 = por %p57, %p58
      %p60 = scmp.ne.s32.totalorder %s51, %s52
      %p61 = scmp.eq.s32.totalorder %s20, 0
      %p62 = por %p60, %p61
      %p63 = scmp.ne.s32.totalorder %s51, %s52
      %p64 = scmp.eq.s32.totalorder %s21, 1
      %p65 = por %p63, %p64
      %p67 = scmp.ne.s32.totalorder %s52, %s66
      %p68 = scmp.eq.s32.totalorder %s21, 0
      %p69 = por %p67, %p68
      %s70 = ssub.s32 %s15, %s22
      %p71 = scmp.eq.s32.totalorder %s70, 0
      %s73 = sadd.s32 %s72, 1
      %s74 = scalar_select %p71, %s72, %s73
      %p77 = pneg %p71
      %p78 = scmp.eq.s32.totalorder %s15, 1
      %p79 = por %p77, %p78
      %p80 = scmp.ne.s32.totalorder %s72, %s75
      %p81 = scmp.eq.s32.totalorder %s15, 0
      %p82 = por %p80, %p81
      %p83 = scmp.ne.s32.totalorder %s72, %s75
      %p84 = scmp.eq.s32.totalorder %s20, 1
      %p85 = por %p83, %p84
      %p86 = scmp.ne.s32.totalorder %s75, %s76
      %p87 = scmp.eq.s32.totalorder %s20, 0
      %p88 = por %p86, %p87
      %p89 = scmp.ne.s32.totalorder %s75, %s76
      %p90 = scmp.eq.s32.totalorder %s21, 1
      %p91 = por %p89, %p90
      %p93 = scmp.ne.s32.totalorder %s76, %s92
      %p94 = scmp.eq.s32.totalorder %s21, 0
      %p95 = por %p93, %p94
      %p96 = scmp.le.s32.totalorder 1, %s15
      %p97 = scmp.lt.s32.totalorder %s15, 3
      %p98 = pnand %p96, %p97
      %p99 = pneg %p98
      // Predicated region
      $region9: #{tpu_custom_call.1} parent=5 // pred_check
        _
      $region10: #{tpu_custom_call.1} parent=5 // pred_check_branch
        %101 = sbr.rel (%p98) target = $region12
      $region11: #{tpu_custom_call.1} parent=5 // pred_region
        %s102 = ssub.s32 %s15, 1
        // Predicated region
        $region13: #{tpu_custom_call.1} parent=11 // pred_check
          %p103 = pneg %p62
        $region14: #{tpu_custom_call.1} parent=11 // pred_check_branch
          %105 = sbr.rel (%p103) target = $region16
        $region15: #{tpu_custom_call.1} parent=11 // pred_region
          %s107 = ssub.s32 16, 16
          %108 = vsyncadd [#allocation6], %s107
          %s110 = sshll.u32 %s1, 4
          %s111 = int_to_ptr.vmem [resolvable:$true] %s110
          %113 = dma.vmem_to_smem %s111, 16, [#allocation7], [#allocation6]
        $region16: #{tpu_custom_call.1} parent=11 // pred_fallthru
          _
      $region12: #{tpu_custom_call.1} parent=5 // pred_fallthru
        _
      %p114 = scmp.lt.s32.totalorder %s15, 2
      // Predicated region
      $region17: #{tpu_custom_call.1} parent=5 // pred_check
        %p115 = pneg %p114
      $region18: #{tpu_custom_call.1} parent=5 // pred_check_branch
        %117 = sbr.rel (%p115) target = $region20
      $region19: #{tpu_custom_call.1} parent=5 // pred_region
        // Predicated region
        $region21: #{tpu_custom_call.1} parent=19 // pred_check
          %p118 = pneg %p35
        $region22: #{tpu_custom_call.1} parent=19 // pred_check_branch
          %120 = sbr.rel (%p118) target = $region24
        $region23: #{tpu_custom_call.1} parent=19 // pred_region
          %s121 = sand.u32 %s25, 1
          %s122 = scalar_lea.sflag [#allocation4], %s121
          %s123 = sand.u32 %s25, 1
          %s124 = smul.addr %s123, 8
          %s125 = scalar_lea.vmem [#allocation3], %s124
          %s127 = ssub.s32 128, 128
          %128 = vsyncadd %s122, %s127
          %s129 = smul.addr %s15, 2
          %s130 = smul.addr %s129, 64
          %s131 = scalar_lea.hbm %s0, %s130
          %s133 = sshll.u32 %s125, 4
          %s134 = int_to_ptr.vmem [resolvable:$true] %s133
          %136 = dma.hbm_to_vmem [thread:$0]  %s131, 128, %s134, %s122
        $region24: #{tpu_custom_call.1} parent=19 // pred_fallthru
          _
      $region20: #{tpu_custom_call.1} parent=5 // pred_fallthru
        _
      %p137 = scmp.le.s32.totalorder 1, %s15
      %p138 = scmp.lt.s32.totalorder %s15, 3
      %p139 = pnand %p137, %p138
      %p140 = pneg %p139
      // Predicated region
      $region25: #{tpu_custom_call.1} parent=5 // pred_check
        _
      $region26: #{tpu_custom_call.1} parent=5 // pred_check_branch
        %142 = sbr.rel (%p139) target = $region28
      $region27: #{tpu_custom_call.1} parent=5 // pred_region
        %s143 = ssub.s32 %s15, 1
        %s144 = sand.u32 %s28, 1
        %s145 = scalar_lea.sflag [#allocation4], %s144
        %s146 = sand.u32 %s28, 1
        %s147 = smul.addr %s146, 8
        %s148 = scalar_lea.vmem [#allocation3], %s147
        // Predicated region
        $region29: #{tpu_custom_call.1} parent=27 // pred_check
          %p149 = pneg %p41
        $region30: #{tpu_custom_call.1} parent=27 // pred_check_branch
          %151 = sbr.rel (%p149) target = $region32
        $region31: #{tpu_custom_call.1} parent=27 // pred_region
          %152 = dma.done %s145, 128
        $region32: #{tpu_custom_call.1} parent=27 // pred_fallthru
          _
        // Predicated region
        $region33: #{tpu_custom_call.1} parent=27 // pred_check
          %p153 = pneg %p62
        $region34: #{tpu_custom_call.1} parent=27 // pred_check_branch
          %155 = sbr.rel (%p153) target = $region36
        $region35: #{tpu_custom_call.1} parent=27 // pred_region
          %156 = dma.done [#allocation6], 16
        $region36: #{tpu_custom_call.1} parent=27 // pred_fallthru
          _
        %157 = sfence
        %s158 = sand.u32 %s28, 1
        %s159 = scalar_lea.sflag [#allocation4], %s158
        %s160 = sand.u32 %s28, 1
        %s161 = smul.addr %s160, 8
        %s162 = scalar_lea.vmem [#allocation3], %s161
        %p163 = pneg %p41
        %p164 = pneg %p38
        %p165 = pneg %p62
        %p166 = pneg %p59
        %p167 = pneg %p88
        %p168 = pneg %p85
        %s169 = sand.u32 %s75, 1
        %s170 = scalar_lea.sflag [#allocation5], %s169
        %s171 = sand.u32 %s75, 1
        %s172 = smul.addr %s171, 8
        %s173 = scalar_lea.vmem [#allocation8], %s172
        %v174 = vld [vmem:[%s148] sm:$0xff]
        %v176 = vcombine.high %v174, %v174
        %vm178 = vcmask 1043456
        %v179 = vsel %vm178, %v174, 0.0
        %v180 = vsel %vm178, %v176, 0.0
        %v181 = vadd.f32 %v179, %v180
        %182 = vadd.xlane.f32.xlu0 %v181
        %v183 = vpop.xlane.xlu0 %182
        %vm184 = vcmask 7168
        %185 = vst.msk [vmem:[#allocation2] sm:$0xff] %vm184, 0.0
        %186 = vst.msk [vmem:[#allocation2 + $0x8] sm:$0xff] %vm184, 0.0
        %vm187 = vcmask 3072
        %188 = vst.msk [vmem:[#allocation2 + $0x10] sm:$0xf] %vm187, 0.0
        %189 = vst.msk [vmem:[#allocation2 + $0x8] sm:$0xf] %vm187, %v183
        %s190 = sld [smem:[#allocation7 + $0x3]]
        %v191 = vstv %s190
        %s192 = sld [smem:[#allocation7]]
        %v193 = vld [vmem:[#allocation2 + $0x7] sm:$0xf]
        %v194 = vstv %s192
        %v195 = vmul.f32 %v194, %v193
        %v196 = vadd.f32 %v191, %v195
        %s197 = sld [smem:[#allocation7 + $0x1]]
        %v198 = vld [vmem:[#allocation2 + $0x8] sm:$0xf]
        %v199 = vstv %s197
        %v200 = vmul.f32 %v199, %v198
        %v201 = vadd.f32 %v196, %v200
        %s202 = sld [smem:[#allocation7 + $0x2]]
        %v203 = vld [vmem:[#allocation2 + $0x9] sm:$0xf]
        %v204 = vstv %s202
        %v205 = vmul.f32 %v204, %v203
        %v206 = vadd.f32 %v201, %v205
        %v207 = vxor.u32 %v206, 2147483648
        %v208 = vmul.f32 %v207, 1.442695
        %v209 = vpow.pop %v208
        %v210 = vadd.f32 %v209, 1.0
        %v211 = vrcp.pop %v210
        %v212 = vmul.f32 1.0, %v211
        %v213 = vld [vmem:[%s148] sm:$0xff]
        %215 = vset.pattern.permute.xlu0 0
        %216 = vperm.xlu0 %215, %v212
        %v217 = vpop.permute.xlu0 %216
        %v219 = vunpack.c.l.s4 839922192
        %v220 = vunpack.c.0.s8 %v219
        %v221 = vlaneseq
        %v222 = vshrl.u32 %v221, 7
        %v223 = vsub.s32 %v220, %v222
        %v224 = vrot.slane %v217, %v223
        %v226 = vmul.f32 %v213, %v224
        %227 = vst [vmem:[%s173] sm:$0xff] %v226
        %s228 = sand.u32 %s75, 1
        %s229 = scalar_lea.sflag [#allocation5], %s228
        %s230 = sand.u32 %s75, 1
        %s231 = smul.addr %s230, 8
        %s232 = scalar_lea.vmem [#allocation8], %s231
        // Predicated region
        $region37: #{tpu_custom_call.1} parent=27 // pred_check
          %p233 = pneg %p85
        $region38: #{tpu_custom_call.1} parent=27 // pred_check_branch
          %235 = sbr.rel (%p233) target = $region40
        $region39: #{tpu_custom_call.1} parent=27 // pred_region
          %s237 = ssub.s32 128, 128
          %238 = vsyncadd %s229, %s237
          %s239 = smul.addr %s20, 2
          %s240 = smul.addr %s239, 64
          %s241 = scalar_lea.hbm %s2, %s240
          %s243 = sshll.u32 %s232, 4
          %s244 = int_to_ptr.vmem [resolvable:$true] %s243
          %246 = dma.vmem_to_hbm [thread:$0]  %s244, 128, %s241, %s229
        $region40: #{tpu_custom_call.1} parent=27 // pred_fallthru
          _
      $region28: #{tpu_custom_call.1} parent=5 // pred_fallthru
        _
      %p247 = scmp.le.s32.totalorder 2, %s15
      // Predicated region
      $region41: #{tpu_custom_call.1} parent=5 // pred_check
        %p248 = pneg %p247
      $region42: #{tpu_custom_call.1} parent=5 // pred_check_branch
        %250 = sbr.rel (%p248) target = $region44
      $region43: #{tpu_custom_call.1} parent=5 // pred_region
        %s251 = ssub.s32 %s15, 2
        // Predicated region
        $region45: #{tpu_custom_call.1} parent=43 // pred_check
          %p252 = pneg %p91
        $region46: #{tpu_custom_call.1} parent=43 // pred_check_branch
          %254 = sbr.rel (%p252) target = $region48
        $region47: #{tpu_custom_call.1} parent=43 // pred_region
          %s255 = sand.u32 %s76, 1
          %s256 = scalar_lea.sflag [#allocation5], %s255
          %s257 = sand.u32 %s76, 1
          %s258 = smul.addr %s257, 8
          %s259 = scalar_lea.vmem [#allocation8], %s258
          %260 = dma.done %s256, 128
        $region48: #{tpu_custom_call.1} parent=43 // pred_fallthru
          _
      $region44: #{tpu_custom_call.1} parent=5 // pred_fallthru
        _
    $region6: #{tpu_custom_call.1} parent=1 // loop_footer
      %s19 = sadd.s32 1, %s15
    $region7: #{tpu_custom_call.1} parent=1 // loop_footer_branch
      %14 = sbr.rel target = $region3
    $region8: #{tpu_custom_call.1} parent=1 // loop_exit
      _
    %261 = vsyncpa [#allocation4], 1
    %s262 = scalar_lea.sflag [#allocation4], 1
    %263 = vsyncpa %s262, 1
    %264 = vsyncpa [#allocation5], 1
    %s265 = scalar_lea.sflag [#allocation5], 1
    %266 = vsyncpa %s265, 1
    %267 = vsyncpa [#allocation6], 1
    %s268 = scalar_lea.sflag [#allocation6], 1
    %269 = vsyncpa %s268, 1

</llo_original>
